<compile_context>
chip_gen: v7x
topology: tpu7x:2x2x1
jax: 0.10.0
libtpu: 0.0.40
codegen_flags: <defaults>
</compile_context>

<pallas_src>
import functools

import jax
import jax.numpy as jnp
from jax import lax
from jax.experimental import pallas as pl
from jax.experimental.pallas import tpu as pltpu


def _round_up(a, m):
    return ((a + m - 1) // m) * m


# ---------------------------------------------------------------------------
# Kernels
# ---------------------------------------------------------------------------
def _conv1x1_kernel(x_ref, w_ref, b_ref, o_ref):
    """kernel_size == 1: one (C_out, C_in) x (C_in, TL) MXU matmul, no halo."""
    acc = jnp.dot(w_ref[...], x_ref[0], preferred_element_type=jnp.float32)
    o_ref[0] = (acc + b_ref[...]).astype(o_ref.dtype)


def _conv1d_fused_kernel(xm_ref, xh_ref, w_ref, b_ref, o_ref, *,
                         kernel_size, dilation):
    """Small-C_in path: stack the K shifted windows along the contraction
    (sublane) axis and run ONE MXU matmul of depth K*C_in.

    xm_ref: (1, C_in, TL)        main activation tile
    xh_ref: (1, C_in, HALO_BLK)  128-aligned block right after the tile
    w_ref : (C_out, K*C_in)      fused weights, tap-major along contraction
    b_ref : (C_out, 1)
    o_ref : (1, C_out, TL)
    """
    tl = o_ref.shape[2]
    x = jnp.concatenate([xm_ref[0], xh_ref[0]], axis=1)        # (C_in, TL+HB)
    taps = [x[:, k * dilation:k * dilation + tl] for k in range(kernel_size)]
    x_stack = jnp.concatenate(taps, axis=0)                    # (K*C_in, TL)
    acc = jnp.dot(w_ref[...], x_stack, preferred_element_type=jnp.float32)
    o_ref[0] = (acc + b_ref[...]).astype(o_ref.dtype)


def _conv1d_tap_kernel(xm_ref, xh_ref, w_ref, b_ref, o_ref, *,
                       kernel_size, dilation):
    """Large-C_in path: K accumulating MXU matmuls of depth C_in each.
    No K*C_in activation stack is materialized; tap 0 comes straight from the
    main tile, taps 1..K-1 are lane-shifted windows of [main | halo].

    w_ref: (K, C_out, C_in)
    """
    tl = o_ref.shape[2]
    xm = xm_ref[0]
    acc = jnp.dot(w_ref[0], xm, preferred_element_type=jnp.float32)
    # TODO(synk): a pltpu.roll-based variant could avoid this single concat.
    x = jnp.concatenate([xm, xh_ref[0]], axis=1)               # (C_in, TL+HB)
    for k in range(1, kernel_size):
        tap = x[:, k * dilation:k * dilation + tl]
        acc = acc + jnp.dot(w_ref[k], tap, preferred_element_type=jnp.float32)
    o_ref[0] = (acc + b_ref[...]).astype(o_ref.dtype)


# ---------------------------------------------------------------------------
# Tiling / VMEM selection (generation-aware)
# ---------------------------------------------------------------------------
def _select_tiling(out_len, c_in, c_out, k, halo_blk, in_itemsize, out_itemsize,
                   fuse_taps, l_tile):
    try:
        vmem_cap = int(pltpu.get_tpu_info().vmem_capacity_bytes)
    except Exception:
        vmem_cap = 64 * 1024 * 1024          # conservative: v7x per-core VMEM
    # ~0.8 * physical: ~51 MiB on v7x (64 MiB), capped at 112 MiB on the
    # 128 MiB v5e/v6e parts.
    vmem_limit = min(int(vmem_cap * 0.8), 112 * 1024 * 1024)
    budget = int(vmem_limit * 0.7)           # headroom for compiler scratch

    align = max(halo_blk, 128)

    def vmem_estimate(tl):
        est = 2 * c_in * tl * in_itemsize                   # main tile, 2x buf
        if k > 1:
            est += 2 * c_in * halo_blk * in_itemsize        # halo tile, 2x buf
        est += 2 * c_out * tl * out_itemsize                # output tile, 2x buf
        est += 2 * k * c_out * c_in * in_itemsize           # weights (<=2x buf)
        est += 2 * c_out * 4                                # bias
        est += c_out * tl * 4                               # f32 accumulator
        if k > 1:                                           # in-kernel temps
            copies = (k + 1) if fuse_taps else 3
            est += copies * c_in * tl * in_itemsize
        return est

    max_tl = _round_up(out_len, 128)
    if l_tile is not None:
        return max(_round_up(min(l_tile, max_tl), align), align), vmem_limit

    tl = align
    for cand in (2048, 1024, 512, 256, 128):
        c_tl = _round_up(min(cand, max_tl), align)
        if vmem_estimate(c_tl) <= budget:
            tl = c_tl
            break
    return tl, vmem_limit


# ---------------------------------------------------------------------------
# Wrapper
# ---------------------------------------------------------------------------
def conv_norm_forward(x, weight, bias=None, *, stride=1, padding=None,
                      dilation=1, transpose=False, l_tile=None,
                      compute_dtype=None, tap_threshold=256):
    """Forward pass of ConvNorm.

    x:       (N, C_in, L)  if transpose=False, else (N, L, C_in)
    weight:  (C_out, C_in, K)
    bias:    (C_out,) or None
    """
    c_out, c_in, k = weight.shape
    if padding is None:
        assert k % 2 == 1
        padding = int(dilation * (k - 1) / 2)
    # TODO(synk): only stride=1 implemented (the module default).
    assert stride == 1

    if transpose:
        # TODO(synk): an NLC-native kernel variant (C_out on lanes) would
        # avoid these two full-HBM transpose passes when C_out >= 128.
        x = jnp.transpose(x, (0, 2, 1))              # (N, L, C) -> (N, C, L)

    n, cx, length = x.shape
    assert cx == c_in
    out_dtype = x.dtype

    halo = dilation * (k - 1)                        # extra input cols per tile
    out_len = length + 2 * padding - halo
    assert out_len > 0

    # Hoisted compute-dtype casts: operands are DMA'd at compute precision.
    if compute_dtype is not None:
        x = x.astype(compute_dtype)
        weight = weight.astype(compute_dtype)
    in_itemsize = jnp.dtype(x.dtype).itemsize
    out_itemsize = jnp.dtype(out_dtype).itemsize

    use_halo = k > 1
    fuse_taps = use_halo and (c_in < tap_threshold)
    halo_blk = _round_up(max(halo, 1), 128) if use_halo else 0

    tl, vmem_limit = _select_tiling(out_len, c_in, c_out, k, halo_blk,
                                    in_itemsize, out_itemsize, fuse_taps, l_tile)
    n_l = pl.cdiv(out_len, tl)
    hb_per_tile = tl // halo_blk if use_halo else 0

    # Zero padding.  For K==1 with padding==0 (the module default) no pad is
    # needed: OOB reads of the partial last tile only feed masked output
    # columns.  Otherwise one wrapper pad supplies the conv zeros and keeps
    # every main/halo block fully in range.
    # TODO(synk): fully in-kernel pad handling (masked loads) would remove
    # this extra HBM read+write of x for the K>1 case.
    if use_halo or padding > 0:
        total = n_l * tl + halo_blk
        x_in = jnp.pad(x, ((0, 0), (0, 0),
                           (padding, total - padding - length)))
    else:
        x_in = x

    if bias is None:
        bias = jnp.zeros((c_out,), jnp.float32)
    bias2d = jnp.asarray(bias).reshape(c_out, 1).astype(jnp.float32)

    # Weight layout + kernel selection.
    if k == 1:
        kernel = _conv1x1_kernel
        w_arr = weight.reshape(c_out, c_in)
        w_block = (c_out, c_in)
    elif fuse_taps:
        kernel = functools.partial(_conv1d_fused_kernel, kernel_size=k,
                                   dilation=dilation)
        # (C_out, C_in, K) -> (C_out, K*C_in), tap-major along contraction.
        w_arr = jnp.transpose(weight, (0, 2, 1)).reshape(c_out, k * c_in)
        w_block = (c_out, k * c_in)
    else:
        kernel = functools.partial(_conv1d_tap_kernel, kernel_size=k,
                                   dilation=dilation)
        w_arr = jnp.transpose(weight, (2, 0, 1))     # (K, C_out, C_in)
        w_block = (k, c_out, c_in)

    operands = [x_in]
    if use_halo:
        operands.append(x_in)
    operands += [w_arr, bias2d]

    def _run(single_buffer_consts):
        # Constant (grid-invariant) weight/bias blocks: single buffer saves
        # VMEM (most valuable on v7x's 64 MiB part).
        const_kw = ({"pipeline_mode": pl.Buffered(1)}
                    if single_buffer_consts else {})
        in_specs = [pl.BlockSpec((1, c_in, tl), lambda b, j: (b, 0, j))]
        if use_halo:
            # 128-aligned halo block immediately to the right of the tile.
            in_specs.append(
                pl.BlockSpec((1, c_in, halo_blk),
                             lambda b, j: (b, 0, (j + 1) * hb_per_tile)))
        in_specs.append(
            pl.BlockSpec(w_block, lambda b, j: (0,) * len(w_block), **const_kw))
        in_specs.append(
            pl.BlockSpec((c_out, 1), lambda b, j: (0, 0), **const_kw))

        return pl.pallas_call(
            kernel,
            out_shape=jax.ShapeDtypeStruct((n, c_out, out_len), out_dtype),
            grid_spec=pltpu.PrefetchScalarGridSpec(
                num_scalar_prefetch=0,
                grid=(n, n_l),
                in_specs=in_specs,
                out_specs=pl.BlockSpec((1, c_out, tl), lambda b, j: (b, 0, j)),
            ),
            compiler_params=pltpu.CompilerParams(
                dimension_semantics=("parallel", "parallel"),
                vmem_limit_bytes=vmem_limit,
            ),
        )(*operands)

    try:
        out = _run(True)
    except Exception:
        # Fallback if this JAX build rejects single-buffered pipeline_mode.
        out = _run(False)

    if transpose:
        out = jnp.transpose(out, (0, 2, 1))          # (N, C, L) -> (N, L, C)
    return out


def _reference_conv1d(x, weight, bias, padding, dilation):
    # lax reference for verification (NCL / OIK).
    out = lax.conv_general_dilated(
        x, weight,
        window_strides=(1,),
        padding=[(padding, padding)],
        rhs_dilation=(dilation,),
        dimension_numbers=("NCH", "OIH", "NCH"))
    return out + bias.reshape(1, -1, 1)


if __name__ == "__main__":
    N, C_IN, C_OUT, L = 2, 4, 8, 16

    key = jax.random.PRNGKey(0)
    kx, kw, kb, kw1, kb1 = jax.random.split(key, 5)
    x = jax.random.normal(kx, (N, C_IN, L), jnp.float32)

    def make_params(kw_key, kb_key, ksz):
        # xavier_uniform with gain('linear') = 1.0, PyTorch Conv1d bias init.
        fan_in, fan_out = C_IN * ksz, C_OUT * ksz
        bound_w = (6.0 / (fan_in + fan_out)) ** 0.5
        w = jax.random.uniform(kw_key, (C_OUT, C_IN, ksz), jnp.float32,
                               minval=-bound_w, maxval=bound_w)
        bound_b = 1.0 / (fan_in ** 0.5)
        b = jax.random.uniform(kb_key, (C_OUT,), jnp.float32,
                               minval=-bound_b, maxval=bound_b)
        return w, b

    # --- ConvNorm(4, 8, kernel_size=3), fused (small-C_in) path -------------
    K = 3
    w3, b3 = make_params(kw, kb, K)
    pad3 = int(1 * (K - 1) / 2)

    out = jax.block_until_ready(conv_norm_forward(x, w3, b3))
    ref = _reference_conv1d(x, w3, b3, pad3, 1)
    assert out.shape == (N, C_OUT, L), out.shape
    assert jnp.allclose(out, ref, atol=1e-5, rtol=1e-5), "K=3 mismatch"

    # per-tap (large-C_in) code path, forced at small C_in for coverage
    out_pt = jax.block_until_ready(conv_norm_forward(x, w3, b3, tap_threshold=1))
    assert jnp.allclose(out_pt, ref, atol=1e-5, rtol=1e-5), "per-tap mismatch"

    # transpose=True path (input NLC)
    out_t = jax.block_until_ready(
        conv_norm_forward(jnp.transpose(x, (0, 2, 1)), w3, b3, transpose=True))
    assert jnp.allclose(jnp.transpose(out_t, (0, 2, 1)), ref,
                        atol=1e-5, rtol=1e-5), "transpose mismatch"

    # dilation=2 (halo = 4)
    DIL = 2
    pad_d = int(DIL * (K - 1) / 2)
    out_d = jax.block_until_ready(conv_norm_forward(x, w3, b3, dilation=DIL))
    ref_d = _reference_conv1d(x, w3, b3, pad_d, DIL)
    assert jnp.allclose(out_d, ref_d, atol=1e-5, rtol=1e-5), "dilation=2 mismatch"

    # kernel_size=1 (the module default): pad-free, halo-free path
    w1, b1 = make_params(kw1, kb1, 1)
    out_1 = jax.block_until_ready(conv_norm_forward(x, w1, b1))
    ref_1 = _reference_conv1d(x, w1, b1, 0, 1)
    assert jnp.allclose(out_1, ref_1, atol=1e-5, rtol=1e-5), "K=1 mismatch"

    # bf16 MXU operands (f32 accumulation), casts hoisted to the wrapper.
    out_bf = jax.block_until_ready(
        conv_norm_forward(x, w3, b3, compute_dtype=jnp.bfloat16))
    assert jnp.allclose(out_bf, ref, atol=5e-2, rtol=5e-2), "bf16 mismatch"

    print("KERNEL_OK")
</pallas_src>

<mosaic_0001>
module attributes {stable_mosaic.version = 11 : i64} {
  func.func @_conv1d_fused_kernel(%arg0: i32, %arg1: i32, %arg2: memref<1x4x128xf32, #tpu.memory_space<vmem>>, %arg3: memref<1x4x128xf32, #tpu.memory_space<vmem>>, %arg4: memref<8x12xf32, #tpu.memory_space<vmem>>, %arg5: memref<8x1xf32, #tpu.memory_space<vmem>>, %arg6: memref<1x8x128xf32, #tpu.memory_space<vmem>>) attributes {dimension_semantics = [#tpu.dimension_semantics<parallel>, #tpu.dimension_semantics<parallel>], iteration_bounds = array<i64: 2, 1>, scalar_prefetch = 0 : i64, scratch_operands = 0 : i64, tpu.core_type = #tpu.core_type<tc>, window_params = [{transform_indices = @transform_0, window_bounds = array<i64: 1, 4, 128>}, {transform_indices = @transform_1, window_bounds = array<i64: 1, 4, 128>}, {pipeline_mode = #tpu.pipeline_mode<synchronous>, transform_indices = @transform_2, window_bounds = array<i64: 8, 12>}, {pipeline_mode = #tpu.pipeline_mode<synchronous>, transform_indices = @transform_3, window_bounds = array<i64: 8, 1>}, {transform_indices = @transform_4, window_bounds = array<i64: 1, 8, 128>}]} {
    %c0 = arith.constant 0 : index
    %c0_0 = arith.constant 0 : index
    %c0_1 = arith.constant 0 : index
    %0 = vector.load %arg2[%c0, %c0_0, %c0_1] : memref<1x4x128xf32, #tpu.memory_space<vmem>>, vector<1x4x128xf32>
    %1 = vector.shape_cast %0 : vector<1x4x128xf32> to vector<4x128xf32>
    %c0_2 = arith.constant 0 : index
    %c0_3 = arith.constant 0 : index
    %c0_4 = arith.constant 0 : index
    %2 = vector.load %arg3[%c0_2, %c0_3, %c0_4] : memref<1x4x128xf32, #tpu.memory_space<vmem>>, vector<1x4x128xf32>
    %3 = vector.shape_cast %2 : vector<1x4x128xf32> to vector<4x128xf32>
    %4 = tpu.concatenate %1, %3 in 1 : vector<4x128xf32>, vector<4x128xf32> -> vector<4x256xf32>
    %5 = vector.extract_strided_slice %4 {offsets = [0, 0], sizes = [4, 128], strides = [1, 1]} : vector<4x256xf32> to vector<4x128xf32>
    %6 = vector.extract_strided_slice %4 {offsets = [0, 1], sizes = [4, 128], strides = [1, 1]} : vector<4x256xf32> to vector<4x128xf32>
    %7 = vector.extract_strided_slice %4 {offsets = [0, 2], sizes = [4, 128], strides = [1, 1]} : vector<4x256xf32> to vector<4x128xf32>
    %8 = tpu.concatenate %5, %6, %7 in 0 : vector<4x128xf32>, vector<4x128xf32>, vector<4x128xf32> -> vector<12x128xf32>
    %c0_5 = arith.constant 0 : index
    %c0_6 = arith.constant 0 : index
    %9 = vector.load %arg4[%c0_5, %c0_6] : memref<8x12xf32, #tpu.memory_space<vmem>>, vector<8x12xf32>
    %cst = arith.constant dense<0.000000e+00> : vector<8x128xf32>
    %10 = tpu.matmul %9, %8, %cst {dimension_numbers = #tpu.dot_dimension_numbers<[1], [0], [0], [1], [0, 0, 1, 1], [], []>} : vector<8x12xf32>, vector<12x128xf32>, vector<8x128xf32> -> vector<8x128xf32>
    %c0_7 = arith.constant 0 : index
    %c0_8 = arith.constant 0 : index
    %11 = vector.load %arg5[%c0_7, %c0_8] : memref<8x1xf32, #tpu.memory_space<vmem>>, vector<8x1xf32>
    %12 = vector.broadcast %11 : vector<8x1xf32> to vector<8x128xf32>
    %13 = arith.addf %10, %12 : vector<8x128xf32>
    %c0_9 = arith.constant 0 : index
    %c0_10 = arith.constant 0 : index
    %c0_11 = arith.constant 0 : index
    %14 = vector.load %arg6[%c0_9, %c0_10, %c0_11] : memref<1x8x128xf32, #tpu.memory_space<vmem>>, vector<1x8x128xf32>
    %15 = vector.shape_cast %14 : vector<1x8x128xf32> to vector<8x128xf32>
    %16 = vector.shape_cast %13 : vector<8x128xf32> to vector<1x8x128xf32>
    tpu.vector_store %arg6[%c0_9, %c0_10, %c0_11], %16 {strides = array<i32>} : memref<1x8x128xf32, #tpu.memory_space<vmem>>, vector<1x8x128xf32>,
    return
  }
  func.func @transform_0(%arg0: i32, %arg1: i32) -> (i32, i32, i32) {
    %c0_i32 = arith.constant 0 : i32
    %c0_i32_0 = arith.constant 0 : i32
    return %arg0, %c0_i32, %arg1 : i32, i32, i32
  }
  func.func @transform_1(%arg0: i32, %arg1: i32) -> (i32, i32, i32) {
    %c1_i32 = arith.constant 1 : i32
    %0 = arith.addi %arg1, %c1_i32 : i32
    %c1_i32_0 = arith.constant 1 : i32
    %1 = arith.muli %0, %c1_i32_0 : i32
    %c0_i32 = arith.constant 0 : i32
    %c0_i32_1 = arith.constant 0 : i32
    return %arg0, %c0_i32, %1 : i32, i32, i32
  }
  func.func @transform_2(%arg0: i32, %arg1: i32) -> (i32, i32) {
    %c0_i32 = arith.constant 0 : i32
    %c0_i32_0 = arith.constant 0 : i32
    %c0_i32_1 = arith.constant 0 : i32
    return %c0_i32, %c0_i32_0 : i32, i32
  }
  func.func @transform_3(%arg0: i32, %arg1: i32) -> (i32, i32) {
    %c0_i32 = arith.constant 0 : i32
    %c0_i32_0 = arith.constant 0 : i32
    %c0_i32_1 = arith.constant 0 : i32
    return %c0_i32, %c0_i32_0 : i32, i32
  }
  func.func @transform_4(%arg0: i32, %arg1: i32) -> (i32, i32, i32) {
    %c0_i32 = arith.constant 0 : i32
    %c0_i32_0 = arith.constant 0 : i32
    return %arg0, %c0_i32, %arg1 : i32, i32, i32
  }
}

module attributes {stable_mosaic.version = 11 : i64} {
  func.func @_conv1d_fused_kernel(%arg0: i32, %arg1: i32, %arg2: memref<1x4x128xf32, #tpu.memory_space<vmem>>, %arg3: memref<1x4x128xf32, #tpu.memory_space<vmem>>, %arg4: memref<8x12xf32, #tpu.memory_space<vmem>>, %arg5: memref<8x1xf32, #tpu.memory_space<vmem>>, %arg6: memref<1x8x128xf32, #tpu.memory_space<vmem>>) attributes {dimension_semantics = [#tpu.dimension_semantics<parallel>, #tpu.dimension_semantics<parallel>], iteration_bounds = array<i64: 2, 1>, scalar_prefetch = 0 : i64, scratch_operands = 0 : i64, tpu.core_type = #tpu.core_type<tc>, window_params = [{transform_indices = @transform_0, window_bounds = array<i64: 1, 4, 128>}, {transform_indices = @transform_1, window_bounds = array<i64: 1, 4, 128>}, {pipeline_mode = #tpu.pipeline_mode<synchronous>, transform_indices = @transform_2, window_bounds = array<i64: 8, 12>}, {pipeline_mode = #tpu.pipeline_mode<synchronous>, transform_indices = @transform_3, window_bounds = array<i64: 8, 1>}, {transform_indices = @transform_4, window_bounds = array<i64: 1, 8, 128>}]} {
    %c0 = arith.constant 0 : index
    %c0_0 = arith.constant 0 : index
    %c0_1 = arith.constant 0 : index
    %0 = vector.load %arg2[%c0, %c0_0, %c0_1] : memref<1x4x128xf32, #tpu.memory_space<vmem>>, vector<1x4x128xf32>
    %1 = vector.shape_cast %0 : vector<1x4x128xf32> to vector<4x128xf32>
    %c0_2 = arith.constant 0 : index
    %c0_3 = arith.constant 0 : index
    %c0_4 = arith.constant 0 : index
    %2 = vector.load %arg3[%c0_2, %c0_3, %c0_4] : memref<1x4x128xf32, #tpu.memory_space<vmem>>, vector<1x4x128xf32>
    %3 = vector.shape_cast %2 : vector<1x4x128xf32> to vector<4x128xf32>
    %4 = tpu.concatenate %1, %3 in 1 : vector<4x128xf32>, vector<4x128xf32> -> vector<4x256xf32>
    %5 = vector.extract_strided_slice %4 {offsets = [0, 0], sizes = [4, 128], strides = [1, 1]} : vector<4x256xf32> to vector<4x128xf32>
    %6 = vector.extract_strided_slice %4 {offsets = [0, 1], sizes = [4, 128], strides = [1, 1]} : vector<4x256xf32> to vector<4x128xf32>
    %7 = vector.extract_strided_slice %4 {offsets = [0, 2], sizes = [4, 128], strides = [1, 1]} : vector<4x256xf32> to vector<4x128xf32>
    %8 = tpu.concatenate %5, %6, %7 in 0 : vector<4x128xf32>, vector<4x128xf32>, vector<4x128xf32> -> vector<12x128xf32>
    %c0_5 = arith.constant 0 : index
    %c0_6 = arith.constant 0 : index
    %9 = vector.load %arg4[%c0_5, %c0_6] : memref<8x12xf32, #tpu.memory_space<vmem>>, vector<8x12xf32>
    %cst = arith.constant dense<0.000000e+00> : vector<8x128xf32>
    %10 = tpu.matmul %9, %8, %cst {dimension_numbers = #tpu.dot_dimension_numbers<[1], [0], [0], [1], [0, 0, 1, 1], [], []>} : vector<8x12xf32>, vector<12x128xf32>, vector<8x128xf32> -> vector<8x128xf32>
    %c0_7 = arith.constant 0 : index
    %c0_8 = arith.constant 0 : index
    %11 = vector.load %arg5[%c0_7, %c0_8] : memref<8x1xf32, #tpu.memory_space<vmem>>, vector<8x1xf32>
    %12 = vector.broadcast %11 : vector<8x1xf32> to vector<8x128xf32>
    %13 = arith.addf %10, %12 : vector<8x128xf32>
    %c0_9 = arith.constant 0 : index
    %c0_10 = arith.constant 0 : index
    %c0_11 = arith.constant 0 : index
    %14 = vector.load %arg6[%c0_9, %c0_10, %c0_11] : memref<1x8x128xf32, #tpu.memory_space<vmem>>, vector<1x8x128xf32>
    %15 = vector.shape_cast %14 : vector<1x8x128xf32> to vector<8x128xf32>
    %16 = vector.shape_cast %13 : vector<8x128xf32> to vector<1x8x128xf32>
    tpu.vector_store %arg6[%c0_9, %c0_10, %c0_11], %16 {strides = array<i32>} : memref<1x8x128xf32, #tpu.memory_space<vmem>>, vector<1x8x128xf32>,
    return
  }
  func.func @transform_0(%arg0: i32, %arg1: i32) -> (i32, i32, i32) {
    %c0_i32 = arith.constant 0 : i32
    %c0_i32_0 = arith.constant 0 : i32
    return %arg0, %c0_i32, %arg1 : i32, i32, i32
  }
  func.func @transform_1(%arg0: i32, %arg1: i32) -> (i32, i32, i32) {
    %c1_i32 = arith.constant 1 : i32
    %0 = arith.addi %arg1, %c1_i32 : i32
    %c1_i32_0 = arith.constant 1 : i32
    %1 = arith.muli %0, %c1_i32_0 : i32
    %c0_i32 = arith.constant 0 : i32
    %c0_i32_1 = arith.constant 0 : i32
    return %arg0, %c0_i32, %1 : i32, i32, i32
  }
  func.func @transform_2(%arg0: i32, %arg1: i32) -> (i32, i32) {
    %c0_i32 = arith.constant 0 : i32
    %c0_i32_0 = arith.constant 0 : i32
    %c0_i32_1 = arith.constant 0 : i32
    return %c0_i32, %c0_i32_0 : i32, i32
  }
  func.func @transform_3(%arg0: i32, %arg1: i32) -> (i32, i32) {
    %c0_i32 = arith.constant 0 : i32
    %c0_i32_0 = arith.constant 0 : i32
    %c0_i32_1 = arith.constant 0 : i32
    return %c0_i32, %c0_i32_0 : i32, i32
  }
  func.func @transform_4(%arg0: i32, %arg1: i32) -> (i32, i32, i32) {
    %c0_i32 = arith.constant 0 : i32
    %c0_i32_0 = arith.constant 0 : i32
    return %arg0, %c0_i32, %arg1 : i32, i32, i32
  }
}

</mosaic_0001>

<llo_original>
// kernel: tpu_custom_call.1
$region0: #{tpu_custom_call.1}
  #allocation0 [shape = 'u32[]', space=smem, size = 0x4, offset = 0x4, fixed_abs, tag = 'smem constant byte address 0x4 - core index']
  #allocation1 [shape = 'u32[144,128]{1,0:T(1,128)}', space=vmem, size = 0x12000, scoped, tag = 'internal scratch']
  %s0 = inlined_call_operand.hbm [shape: f32[2,4,256], index: 0, kind: input, shape index: {}]
  %s1 = inlined_call_operand.hbm [shape: f32[2,4,256], index: 1, kind: input, shape index: {}]
  %s2 = inlined_call_operand.vmem [shape: f32[8,12], index: 2, kind: input, shape index: {}]
  %s3 = inlined_call_operand.vmem [shape: f32[8,1], index: 3, kind: input, shape index: {}]
  %s4 = inlined_call_operand.hbm [shape: f32[2,8,16], index: 4, kind: output, shape index: {}]
  %s5 = sld [smem:[#allocation0]]
  $region57: #{tpu_custom_call.1} parent=0
    _
  %s7 = ssub.s32 1, %s5
  %s8 = scalar_select 0, %s7, %s5
  $region1: #{tpu_custom_call.1} parent=0
    #allocation2 [shape = 'u8[4096]{0}', space=vmem, size = 0x1000, scoped, tag = 'input window, operand 0']
    #allocation3 [shape = 's32[2]{0}', space=sflag, size = 0x8, scoped, tag = 'scoped memory for tpu_custom_call.1']
    #allocation4 [shape = 's32[2]{0}', space=sflag, size = 0x8, scoped, tag = 'scoped memory for tpu_custom_call.1']
    #allocation5 [shape = 'u8[4096]{0}', space=vmem, size = 0x1000, scoped, tag = 'input window, operand 1']
    #allocation6 [shape = 's32[2]{0}', space=sflag, size = 0x8, scoped, tag = 'scoped memory for tpu_custom_call.1']
    #allocation7 [shape = 'u8[8192]{0}', space=vmem, size = 0x2000, scoped, tag = 'output window, operand 0']
    %9 = vsyncpa [#allocation3], 0
    %s10 = scalar_lea.sflag [#allocation3], 1
    %11 = vsyncpa %s10, 0
    %12 = vsyncpa [#allocation6], 0
    %s13 = scalar_lea.sflag [#allocation6], 1
    %14 = vsyncpa %s13, 0
    %15 = vsyncpa [#allocation4], 0
    %s16 = scalar_lea.sflag [#allocation4], 1
    %17 = vsyncpa %s16, 0
    loop: start=0, step=1, limit=4
    $region2: #{tpu_custom_call.1} parent=1 // loop_pre_header
      _
    $region3: #{tpu_custom_call.1} parent=1 // loop_header
      %s19 = sphi 0, %s23
      %p20 = scmp.ge.s32.totalorder %s19, 4
      %s26 = sphi 0, %s38
      %s27 = sphi 0, %s34
      %s28 = sphi 0, %s26
      %s29 = sphi 0, %s27
      %s30 = sphi 0, %s28
      %s31 = sphi 0, %s29
      %s43 = sphi 0, %s45
      %s46 = sphi 0, %s43
      %s47 = sphi 0, %s46
      %s63 = sphi 0, %s47
      %s73 = sphi 0, %s75
      %s76 = sphi 0, %s73
      %s77 = sphi 0, %s76
      %s93 = sphi 0, %s77
      %s97 = sphi 0, %s97
      %s99 = sphi 0, %s97
      %s100 = sphi 0, %s99
      %s114 = sphi 0, %s100
      %s118 = sphi 0, %s118
      %s120 = sphi 0, %s118
      %s121 = sphi 0, %s120
      %s135 = sphi 0, %s121
      %s143 = sphi 0, %s145
      %s146 = sphi 0, %s143
      %s147 = sphi 0, %s146
      %s163 = sphi 0, %s147
    $region4: #{tpu_custom_call.1} parent=1 // loop_header_branch
      %22 = sbr.rel (%p20) target = $region8
    $region5: #{tpu_custom_call.1} parent=1 // loop_body
      %s24 = ssub.s32 %s19, 1
      %s25 = ssub.s32 %s19, 2
      %s32 = sadd.s32 1, %s27
      %p33 = scmp.ge.s32.totalorder %s32, 1
      %s34 = scalar_select %p33, 0, %s32
      %s35 = sadd.s32 1, %s26
      %s36 = scalar_select %p33, %s35, %s26
      %p37 = scmp.ge.s32.totalorder %s36, 2
      %s38 = scalar_select %p37, 0, %s36
      %s39 = ssub.s32 %s26, %s38
      %s40 = ssub.s32 %s27, %s34
      %s41 = sor.u32 %s39, %s40
      %p42 = scmp.eq.s32.totalorder %s41, 0
      %s44 = sadd.s32 %s43, 1
      %s45 = scalar_select %p42, %s43, %s44
      %p48 = pneg %p42
      %p49 = scmp.eq.s32.totalorder %s19, 1
      %p50 = por %p48, %p49
      %p51 = scmp.ne.s32.totalorder %s43, %s46
      %p52 = scmp.eq.s32.totalorder %s19, 0
      %p53 = por %p51, %p52
      %p54 = scmp.ne.s32.totalorder %s43, %s46
      %p55 = scmp.eq.s32.totalorder %s24, 1
      %p56 = por %p54, %p55
      %p57 = scmp.ne.s32.totalorder %s46, %s47
      %p58 = scmp.eq.s32.totalorder %s24, 0
      %p59 = por %p57, %p58
      %p60 = scmp.ne.s32.totalorder %s46, %s47
      %p61 = scmp.eq.s32.totalorder %s25, 1
      %p62 = por %p60, %p61
      %p64 = scmp.ne.s32.totalorder %s47, %s63
      %p65 = scmp.eq.s32.totalorder %s25, 0
      %p66 = por %p64, %p65
      %s67 = sadd.s32 %s27, 1
      %s68 = sadd.s32 %s34, 1
      %s69 = ssub.s32 %s26, %s38
      %s70 = ssub.s32 %s67, %s68
      %s71 = sor.u32 %s69, %s70
      %p72 = scmp.eq.s32.totalorder %s71, 0
      %s74 = sadd.s32 %s73, 1
      %s75 = scalar_select %p72, %s73, %s74
      %p78 = pneg %p72
      %p79 = scmp.eq.s32.totalorder %s19, 1
      %p80 = por %p78, %p79
      %p81 = scmp.ne.s32.totalorder %s73, %s76
      %p82 = scmp.eq.s32.totalorder %s19, 0
      %p83 = por %p81, %p82
      %p84 = scmp.ne.s32.totalorder %s73, %s76
      %p85 = scmp.eq.s32.totalorder %s24, 1
      %p86 = por %p84, %p85
      %p87 = scmp.ne.s32.totalorder %s76, %s77
      %p88 = scmp.eq.s32.totalorder %s24, 0
      %p89 = por %p87, %p88
      %p90 = scmp.ne.s32.totalorder %s76, %s77
      %p91 = scmp.eq.s32.totalorder %s25, 1
      %p92 = por %p90, %p91
      %p94 = scmp.ne.s32.totalorder %s77, %s93
      %p95 = scmp.eq.s32.totalorder %s25, 0
      %p96 = por %p94, %p95
      %s98 = sadd.s32 %s97, 1
      %p101 = scmp.eq.s32.totalorder %s19, 1
      %p102 = scmp.ne.s32.totalorder %s97, %s99
      %p103 = scmp.eq.s32.totalorder %s19, 0
      %p104 = por %p102, %p103
      %p105 = scmp.ne.s32.totalorder %s97, %s99
      %p106 = scmp.eq.s32.totalorder %s24, 1
      %p107 = por %p105, %p106
      %p108 = scmp.ne.s32.totalorder %s99, %s100
      %p109 = scmp.eq.s32.totalorder %s24, 0
      %p110 = por %p108, %p109
      %p111 = scmp.ne.s32.totalorder %s99, %s100
      %p112 = scmp.eq.s32.totalorder %s25, 1
      %p113 = por %p111, %p112
      %p115 = scmp.ne.s32.totalorder %s100, %s114
      %p116 = scmp.eq.s32.totalorder %s25, 0
      %p117 = por %p115, %p116
      %s119 = sadd.s32 %s118, 1
      %p122 = scmp.eq.s32.totalorder %s19, 1
      %p123 = scmp.ne.s32.totalorder %s118, %s120
      %p124 = scmp.eq.s32.totalorder %s19, 0
      %p125 = por %p123, %p124
      %p126 = scmp.ne.s32.totalorder %s118, %s120
      %p127 = scmp.eq.s32.totalorder %s24, 1
      %p128 = por %p126, %p127
      %p129 = scmp.ne.s32.totalorder %s120, %s121
      %p130 = scmp.eq.s32.totalorder %s24, 0
      %p131 = por %p129, %p130
      %p132 = scmp.ne.s32.totalorder %s120, %s121
      %p133 = scmp.eq.s32.totalorder %s25, 1
      %p134 = por %p132, %p133
      %p136 = scmp.ne.s32.totalorder %s121, %s135
      %p137 = scmp.eq.s32.totalorder %s25, 0
      %p138 = por %p136, %p137
      %s139 = ssub.s32 %s26, %s38
      %s140 = ssub.s32 %s27, %s34
      %s141 = sor.u32 %s139, %s140
      %p142 = scmp.eq.s32.totalorder %s141, 0
      %s144 = sadd.s32 %s143, 1
      %s145 = scalar_select %p142, %s143, %s144
      %p148 = pneg %p142
      %p149 = scmp.eq.s32.totalorder %s19, 1
      %p150 = por %p148, %p149
      %p151 = scmp.ne.s32.totalorder %s143, %s146
      %p152 = scmp.eq.s32.totalorder %s19, 0
      %p153 = por %p151, %p152
      %p154 = scmp.ne.s32.totalorder %s143, %s146
      %p155 = scmp.eq.s32.totalorder %s24, 1
      %p156 = por %p154, %p155
      %p157 = scmp.ne.s32.totalorder %s146, %s147
      %p158 = scmp.eq.s32.totalorder %s24, 0
      %p159 = por %p157, %p158
      %p160 = scmp.ne.s32.totalorder %s146, %s147
      %p161 = scmp.eq.s32.totalorder %s25, 1
      %p162 = por %p160, %p161
      %p164 = scmp.ne.s32.totalorder %s147, %s163
      %p165 = scmp.eq.s32.totalorder %s25, 0
      %p166 = por %p164, %p165
      %p167 = scmp.le.s32.totalorder 1, %s19
      %p168 = scmp.lt.s32.totalorder %s19, 3
      %p169 = pnand %p167, %p168
      %p170 = pneg %p169
      // Predicated region
      $region9: #{tpu_custom_call.1} parent=5 // pred_check
        _
      $region10: #{tpu_custom_call.1} parent=5 // pred_check_branch
        %172 = sbr.rel (%p169) target = $region12
      $region11: #{tpu_custom_call.1} parent=5 // pred_region
        %s173 = ssub.s32 %s19, 1
        // Predicated region
        $region13: #{tpu_custom_call.1} parent=11 // pred_check
          %p174 = pneg %p110
        $region14: #{tpu_custom_call.1} parent=11 // pred_check_branch
          %176 = sbr.rel (%p174) target = $region16
        $region15: #{tpu_custom_call.1} parent=11 // pred_region
          _
        $region16: #{tpu_custom_call.1} parent=11 // pred_fallthru
          _
        // Predicated region
        $region17: #{tpu_custom_call.1} parent=11 // pred_check
          %p177 = pneg %p131
        $region18: #{tpu_custom_call.1} parent=11 // pred_check_branch
          %179 = sbr.rel (%p177) target = $region20
        $region19: #{tpu_custom_call.1} parent=11 // pred_region
          _
        $region20: #{tpu_custom_call.1} parent=11 // pred_fallthru
          _
      $region12: #{tpu_custom_call.1} parent=5 // pred_fallthru
        _
      %p180 = scmp.lt.s32.totalorder %s19, 2
      // Predicated region
      $region21: #{tpu_custom_call.1} parent=5 // pred_check
        %p181 = pneg %p180
      $region22: #{tpu_custom_call.1} parent=5 // pred_check_branch
        %183 = sbr.rel (%p181) target = $region24
      $region23: #{tpu_custom_call.1} parent=5 // pred_region
        // Predicated region
        $region25: #{tpu_custom_call.1} parent=23 // pred_check
          %p184 = pneg %p53
        $region26: #{tpu_custom_call.1} parent=23 // pred_check_branch
          %186 = sbr.rel (%p184) target = $region28
        $region27: #{tpu_custom_call.1} parent=23 // pred_region
          %s187 = sand.u32 %s43, 1
          %s188 = scalar_lea.sflag [#allocation3], %s187
          %s189 = sand.u32 %s43, 1
          %s190 = smul.addr %s189, 4
          %s191 = scalar_lea.vmem [#allocation2], %s190
          %s193 = ssub.s32 64, 64
          %194 = vsyncadd %s188, %s193
          %s195 = smul.addr %s26, 2
          %s196 = sadd.s32 %s27, %s195
          %s197 = smul.addr %s196, 64
          %s198 = scalar_lea.hbm %s0, %s197
          %s200 = sshll.u32 %s191, 4
          %s201 = int_to_ptr.vmem [resolvable:$true] %s200
          %203 = dma.hbm_to_vmem [thread:$0]  %s198, 64, %s201, %s188
        $region28: #{tpu_custom_call.1} parent=23 // pred_fallthru
          _
        // Predicated region
        $region29: #{tpu_custom_call.1} parent=23 // pred_check
          %p204 = pneg %p83
        $region30: #{tpu_custom_call.1} parent=23 // pred_check_branch
          %206 = sbr.rel (%p204) target = $region32
        $region31: #{tpu_custom_call.1} parent=23 // pred_region
          %s207 = sand.u32 %s73, 1
          %s208 = scalar_lea.sflag [#allocation6], %s207
          %s209 = sand.u32 %s73, 1
          %s210 = smul.addr %s209, 4
          %s211 = scalar_lea.vmem [#allocation5], %s210
          %s212 = sadd.s32 %s27, 1
          %s214 = ssub.s32 64, 64
          %215 = vsyncadd %s208, %s214
          %s216 = smul.addr %s26, 2
          %s217 = sadd.s32 %s212, %s216
          %s218 = smul.addr %s217, 64
          %s219 = scalar_lea.hbm %s1, %s218
          %s221 = sshll.u32 %s211, 4
          %s222 = int_to_ptr.vmem [resolvable:$true] %s221
          %224 = dma.hbm_to_vmem [thread:$0]  %s219, 64, %s222, %s208
        $region32: #{tpu_custom_call.1} parent=23 // pred_fallthru
          _
      $region24: #{tpu_custom_call.1} parent=5 // pred_fallthru
        _
      %p225 = scmp.le.s32.totalorder 1, %s19
      %p226 = scmp.lt.s32.totalorder %s19, 3
      %p227 = pnand %p225, %p226
      %p228 = pneg %p227
      // Predicated region
      $region33: #{tpu_custom_call.1} parent=5 // pred_check
        _
      $region34: #{tpu_custom_call.1} parent=5 // pred_check_branch
        %230 = sbr.rel (%p227) target = $region36
      $region35: #{tpu_custom_call.1} parent=5 // pred_region
        %s231 = ssub.s32 %s19, 1
        %s232 = sand.u32 %s46, 1
        %s233 = scalar_lea.sflag [#allocation3], %s232
        %s234 = sand.u32 %s46, 1
        %s235 = smul.addr %s234, 4
        %s236 = scalar_lea.vmem [#allocation2], %s235
        // Predicated region
        $region37: #{tpu_custom_call.1} parent=35 // pred_check
          %p237 = pneg %p59
        $region38: #{tpu_custom_call.1} parent=35 // pred_check_branch
          %239 = sbr.rel (%p237) target = $region40
        $region39: #{tpu_custom_call.1} parent=35 // pred_region
          %240 = dma.done %s233, 64
        $region40: #{tpu_custom_call.1} parent=35 // pred_fallthru
          _
        %s241 = sand.u32 %s76, 1
        %s242 = scalar_lea.sflag [#allocation6], %s241
        %s243 = sand.u32 %s76, 1
        %s244 = smul.addr %s243, 4
        %s245 = scalar_lea.vmem [#allocation5], %s244
        // Predicated region
        $region41: #{tpu_custom_call.1} parent=35 // pred_check
          %p246 = pneg %p89
        $region42: #{tpu_custom_call.1} parent=35 // pred_check_branch
          %248 = sbr.rel (%p246) target = $region44
        $region43: #{tpu_custom_call.1} parent=35 // pred_region
          %249 = dma.done %s242, 64
        $region44: #{tpu_custom_call.1} parent=35 // pred_fallthru
          _
        %s250 = sand.u32 %s46, 1
        %s251 = scalar_lea.sflag [#allocation3], %s250
        %s252 = sand.u32 %s46, 1
        %s253 = smul.addr %s252, 4
        %s254 = scalar_lea.vmem [#allocation2], %s253
        %p255 = pneg %p59
        %p256 = pneg %p56
        %s257 = sand.u32 %s76, 1
        %s258 = scalar_lea.sflag [#allocation6], %s257
        %s259 = sand.u32 %s76, 1
        %s260 = smul.addr %s259, 4
        %s261 = scalar_lea.vmem [#allocation5], %s260
        %p262 = pneg %p89
        %p263 = pneg %p86
        %p264 = pneg %p110
        %p265 = pneg %p107
        %p266 = pneg %p131
        %p267 = pneg %p128
        %p268 = pneg %p159
        %p269 = pneg %p156
        %s270 = sand.u32 %s146, 1
        %s271 = scalar_lea.sflag [#allocation4], %s270
        %s272 = sand.u32 %s146, 1
        %s273 = smul.addr %s272, 8
        %s274 = scalar_lea.vmem [#allocation7], %s273
        %s275 = sadd.s32 %s29, 1
        %v276 = vld [vmem:[%s236] sm:$0xf]
        %v277 = vld [vmem:[%s245] sm:$0xf]
        %v280 = vrot.slane %v276, 4
        %v281 = vrot.slane %v277, 4
        %282 = vrot.lane.b32.xlu0 %v280, 127
        %v283 = vpop.permute.xlu0 %282
        %284 = vrot.lane.b32.xlu0 %v281, 127
        %v285 = vpop.permute.xlu0 %284
        %vm286 = vcmask 1039360
        %v287 = vsel %vm286, %v283, %v285
        %289 = vrot.lane.b32.xlu0 %v276, 126
        %v290 = vpop.permute.xlu0 %289
        %291 = vrot.lane.b32.xlu0 %v277, 126
        %v292 = vpop.permute.xlu0 %291
        %vm293 = vcmask 1031168
        %v294 = vsel %vm293, %v290, %v292
        %vm295 = vcmask 1043456
        %v296 = vsel %vm295, %v276, %v287
        %v297 = vld [vmem:[%s2] sm:$0xff]
        %v298 = vld [vmem:[%s3] sm:$0xff]
        %300 = vset.pattern.permute.xlu0 0
        %301 = vperm.xlu0 %300, %v298
        %v302 = vpop.permute.xlu0 %301
        %vm304 = vcmask 97280
        %v306 = vsel %vm304, %v297, 0
        %v308 = vsel %vm295, %v294, 0
        %310 = vmatprep.subr.mxu0 0.0
        %311 = vmatpush1.msra.mxu0 %v296
        %312 = vmatprep.subr.mxu0 0.0
        %313 = vmatpush1.msra.mxu0 %v308
        %314 = vmatprep.subr.mxu0 0.0
        %315 = vmatpush1.msra.mxu0 0.0
        %316 = vmatprep.subr.mxu0 0.0
        %317 = vmatpush1.msra.mxu0 0.0
        %318 = vmatprep.subr.mxu0 0.0
        %319 = vmatpush1.msra.mxu0 0.0
        %320 = vmatprep.subr.mxu0 0.0
        %321 = vmatpush1.msra.mxu0 0.0
        %322 = vmatprep.subr.mxu0 0.0
        %323 = vmatpush1.msra.mxu0 0.0
        %324 = vmatprep.subr.mxu0 0.0
        %325 = vmatpush1.msra.mxu0 0.0
        %326 = vmatprep.subr.mxu0 0.0
        %327 = vmatpush1.msra.mxu0 0.0
        %328 = vmatprep.subr.mxu0 0.0
        %329 = vmatpush1.msra.mxu0 0.0
        %330 = vmatprep.subr.mxu0 0.0
        %331 = vmatpush1.msra.mxu0 0.0
        %332 = vmatprep.subr.mxu0 0.0
        %333 = vmatpush1.msra.mxu0 0.0
        %334 = vmatprep.subr.mxu0 0.0
        %335 = vmatpush1.msra.mxu0 0.0
        %336 = vmatprep.subr.mxu0 0.0
        %337 = vmatpush1.msra.mxu0 0.0
        %338 = vmatprep.subr.mxu0 0.0
        %339 = vmatpush1.msra.mxu0 0.0
        %340 = vmatprep.subr.mxu0 0.0
        %341 = vmatpush1.msra.mxu0 0.0
        %342 = vmatprep.subr.mxu0 0.0
        %343 = vmatpush1.msra.mxu0 0.0
        %344 = vmatprep.subr.mxu0 0.0
        %345 = vmatpush1.msra.mxu0 0.0
        %346 = vmatprep.subr.mxu0 0.0
        %347 = vmatpush1.msra.mxu0 0.0
        %348 = vmatprep.subr.mxu0 0.0
        %349 = vmatpush1.msra.mxu0 0.0
        %350 = vmatprep.subr.mxu0 0.0
        %351 = vmatpush1.msra.mxu0 0.0
        %352 = vmatprep.subr.mxu0 0.0
        %353 = vmatpush1.msra.mxu0 0.0
        %354 = vmatprep.subr.mxu0 0.0
        %355 = vmatpush1.msra.mxu0 0.0
        %356 = vmatprep.subr.mxu0 0.0
        %357 = vmatpush1.msra.mxu0 0.0
        %358 = vmatprep.subr.mxu0 0.0
        %359 = vmatpush1.msra.mxu0 0.0
        %360 = vmatprep.subr.mxu0 0.0
        %361 = vmatpush1.msra.mxu0 0.0
        %362 = vmatprep.subr.mxu0 0.0
        %363 = vmatpush1.msra.mxu0 0.0
        %364 = vmatprep.subr.mxu0 0.0
        %365 = vmatpush1.msra.mxu0 0.0
        %366 = vmatprep.subr.mxu0 0.0
        %367 = vmatpush1.msra.mxu0 0.0
        %368 = vmatprep.subr.mxu0 0.0
        %369 = vmatpush1.msra.mxu0 0.0
        %370 = vmatprep.subr.mxu0 0.0
        %371 = vmatpush1.msra.mxu0 0.0
        %372 = vmatprep.subr.mxu0 0.0
        %373 = vmatpush1.msra.mxu0 0.0
        %374 = vmatprep.mubr.f32.mxu0 0.0
        %375 = vmatmul.mubr.f32.gmra.mrb[0].mxu0 %v306
        %v376 = vpop.f32.mrb[0].mxu0
        %v377 = vadd.f32 %v302, %v376
        %v378 = vpop.f32.mrb[0].mxu0
        %379 = vdwg.mxu0
        %380 = vst [vmem:[%s274] sm:$0xff] %v377
        %s381 = sand.u32 %s146, 1
        %s382 = scalar_lea.sflag [#allocation4], %s381
        %s383 = sand.u32 %s146, 1
        %s384 = smul.addr %s383, 8
        %s385 = scalar_lea.vmem [#allocation7], %s384
        // Predicated region
        $region45: #{tpu_custom_call.1} parent=35 // pred_check
          %p386 = pneg %p156
        $region46: #{tpu_custom_call.1} parent=35 // pred_check_branch
          %388 = sbr.rel (%p386) target = $region48
        $region47: #{tpu_custom_call.1} parent=35 // pred_region
          %s390 = ssub.s32 128, 128
          %391 = vsyncadd %s382, %s390
          %s392 = sadd.s32 %s29, %s28
          %s393 = smul.addr %s392, 128
          %s394 = scalar_lea.hbm %s4, %s393
          %s396 = sshll.u32 %s385, 4
          %s397 = int_to_ptr.vmem [resolvable:$true] %s396
          %399 = dma.vmem_to_hbm [thread:$0]  %s397, 128, %s394, %s382
        $region48: #{tpu_custom_call.1} parent=35 // pred_fallthru
          _
      $region36: #{tpu_custom_call.1} parent=5 // pred_fallthru
        _
      %p400 = scmp.le.s32.totalorder 2, %s19
      // Predicated region
      $region49: #{tpu_custom_call.1} parent=5 // pred_check
        %p401 = pneg %p400
      $region50: #{tpu_custom_call.1} parent=5 // pred_check_branch
        %403 = sbr.rel (%p401) target = $region52
      $region51: #{tpu_custom_call.1} parent=5 // pred_region
        %s404 = ssub.s32 %s19, 2
        // Predicated region
        $region53: #{tpu_custom_call.1} parent=51 // pred_check
          %p405 = pneg %p162
        $region54: #{tpu_custom_call.1} parent=51 // pred_check_branch
          %407 = sbr.rel (%p405) target = $region56
        $region55: #{tpu_custom_call.1} parent=51 // pred_region
          %s408 = sand.u32 %s147, 1
          %s409 = scalar_lea.sflag [#allocation4], %s408
          %s410 = sand.u32 %s147, 1
          %s411 = smul.addr %s410, 8
          %s412 = scalar_lea.vmem [#allocation7], %s411
          %413 = dma.done %s409, 128
        $region56: #{tpu_custom_call.1} parent=51 // pred_fallthru
          _
      $region52: #{tpu_custom_call.1} parent=5 // pred_fallthru
        _
    $region6: #{tpu_custom_call.1} parent=1 // loop_footer
      %s23 = sadd.s32 1, %s19
    $region7: #{tpu_custom_call.1} parent=1 // loop_footer_branch
      %18 = sbr.rel target = $region3
    $region8: #{tpu_custom_call.1} parent=1 // loop_exit
      _
    %414 = vsyncpa [#allocation3], 1
    %s415 = scalar_lea.sflag [#allocation3], 1
    %416 = vsyncpa %s415, 1
    %417 = vsyncpa [#allocation6], 1
    %s418 = scalar_lea.sflag [#allocation6], 1
    %419 = vsyncpa %s418, 1
    %420 = vsyncpa [#allocation4], 1
    %s421 = scalar_lea.sflag [#allocation4], 1
    %422 = vsyncpa %s421, 1

// kernel: tpu_custom_call.1
$region0: #{tpu_custom_call.1}
  #allocation0 [shape = 'u32[]', space=smem, size = 0x4, offset = 0x4, fixed_abs, tag = 'smem constant byte address 0x4 - core index']
  #allocation1 [shape = 'u32[144,128]{1,0:T(1,128)}', space=vmem, size = 0x12000, scoped, tag = 'internal scratch']
  %s0 = inlined_call_operand.hbm [shape: f32[2,4,256], index: 0, kind: input, shape index: {}]
  %s1 = inlined_call_operand.hbm [shape: f32[2,4,256], index: 1, kind: input, shape index: {}]
  %s2 = inlined_call_operand.vmem [shape: f32[8,12], index: 2, kind: input, shape index: {}]
  %s3 = inlined_call_operand.vmem [shape: f32[8,1], index: 3, kind: input, shape index: {}]
  %s4 = inlined_call_operand.hbm [shape: f32[2,8,16], index: 4, kind: output, shape index: {}]
  %s5 = sld [smem:[#allocation0]]
  $region57: #{tpu_custom_call.1} parent=0
    _
  %s7 = ssub.s32 1, %s5
  %s8 = scalar_select 0, %s7, %s5
  $region1: #{tpu_custom_call.1} parent=0
    #allocation2 [shape = 'u8[4096]{0}', space=vmem, size = 0x1000, scoped, tag = 'input window, operand 0']
    #allocation3 [shape = 's32[2]{0}', space=sflag, size = 0x8, scoped, tag = 'scoped memory for tpu_custom_call.1']
    #allocation4 [shape = 's32[2]{0}', space=sflag, size = 0x8, scoped, tag = 'scoped memory for tpu_custom_call.1']
    #allocation5 [shape = 'u8[4096]{0}', space=vmem, size = 0x1000, scoped, tag = 'input window, operand 1']
    #allocation6 [shape = 's32[2]{0}', space=sflag, size = 0x8, scoped, tag = 'scoped memory for tpu_custom_call.1']
    #allocation7 [shape = 'u8[8192]{0}', space=vmem, size = 0x2000, scoped, tag = 'output window, operand 0']
    %9 = vsyncpa [#allocation3], 0
    %s10 = scalar_lea.sflag [#allocation3], 1
    %11 = vsyncpa %s10, 0
    %12 = vsyncpa [#allocation6], 0
    %s13 = scalar_lea.sflag [#allocation6], 1
    %14 = vsyncpa %s13, 0
    %15 = vsyncpa [#allocation4], 0
    %s16 = scalar_lea.sflag [#allocation4], 1
    %17 = vsyncpa %s16, 0
    loop: start=0, step=1, limit=4
    $region2: #{tpu_custom_call.1} parent=1 // loop_pre_header
      _
    $region3: #{tpu_custom_call.1} parent=1 // loop_header
      %s19 = sphi 0, %s23
      %p20 = scmp.ge.s32.totalorder %s19, 4
      %s26 = sphi 0, %s38
      %s27 = sphi 0, %s34
      %s28 = sphi 0, %s26
      %s29 = sphi 0, %s27
      %s30 = sphi 0, %s28
      %s31 = sphi 0, %s29
      %s43 = sphi 0, %s45
      %s46 = sphi 0, %s43
      %s47 = sphi 0, %s46
      %s63 = sphi 0, %s47
      %s73 = sphi 0, %s75
      %s76 = sphi 0, %s73
      %s77 = sphi 0, %s76
      %s93 = sphi 0, %s77
      %s97 = sphi 0, %s97
      %s99 = sphi 0, %s97
      %s100 = sphi 0, %s99
      %s114 = sphi 0, %s100
      %s118 = sphi 0, %s118
      %s120 = sphi 0, %s118
      %s121 = sphi 0, %s120
      %s135 = sphi 0, %s121
      %s143 = sphi 0, %s145
      %s146 = sphi 0, %s143
      %s147 = sphi 0, %s146
      %s163 = sphi 0, %s147
    $region4: #{tpu_custom_call.1} parent=1 // loop_header_branch
      %22 = sbr.rel (%p20) target = $region8
    $region5: #{tpu_custom_call.1} parent=1 // loop_body
      %s24 = ssub.s32 %s19, 1
      %s25 = ssub.s32 %s19, 2
      %s32 = sadd.s32 1, %s27
      %p33 = scmp.ge.s32.totalorder %s32, 1
      %s34 = scalar_select %p33, 0, %s32
      %s35 = sadd.s32 1, %s26
      %s36 = scalar_select %p33, %s35, %s26
      %p37 = scmp.ge.s32.totalorder %s36, 2
      %s38 = scalar_select %p37, 0, %s36
      %s39 = ssub.s32 %s26, %s38
      %s40 = ssub.s32 %s27, %s34
      %s41 = sor.u32 %s39, %s40
      %p42 = scmp.eq.s32.totalorder %s41, 0
      %s44 = sadd.s32 %s43, 1
      %s45 = scalar_select %p42, %s43, %s44
      %p48 = pneg %p42
      %p49 = scmp.eq.s32.totalorder %s19, 1
      %p50 = por %p48, %p49
      %p51 = scmp.ne.s32.totalorder %s43, %s46
      %p52 = scmp.eq.s32.totalorder %s19, 0
      %p53 = por %p51, %p52
      %p54 = scmp.ne.s32.totalorder %s43, %s46
      %p55 = scmp.eq.s32.totalorder %s24, 1
      %p56 = por %p54, %p55
      %p57 = scmp.ne.s32.totalorder %s46, %s47
      %p58 = scmp.eq.s32.totalorder %s24, 0
      %p59 = por %p57, %p58
      %p60 = scmp.ne.s32.totalorder %s46, %s47
      %p61 = scmp.eq.s32.totalorder %s25, 1
      %p62 = por %p60, %p61
      %p64 = scmp.ne.s32.totalorder %s47, %s63
      %p65 = scmp.eq.s32.totalorder %s25, 0
      %p66 = por %p64, %p65
      %s67 = sadd.s32 %s27, 1
      %s68 = sadd.s32 %s34, 1
      %s69 = ssub.s32 %s26, %s38
      %s70 = ssub.s32 %s67, %s68
      %s71 = sor.u32 %s69, %s70
      %p72 = scmp.eq.s32.totalorder %s71, 0
      %s74 = sadd.s32 %s73, 1
      %s75 = scalar_select %p72, %s73, %s74
      %p78 = pneg %p72
      %p79 = scmp.eq.s32.totalorder %s19, 1
      %p80 = por %p78, %p79
      %p81 = scmp.ne.s32.totalorder %s73, %s76
      %p82 = scmp.eq.s32.totalorder %s19, 0
      %p83 = por %p81, %p82
      %p84 = scmp.ne.s32.totalorder %s73, %s76
      %p85 = scmp.eq.s32.totalorder %s24, 1
      %p86 = por %p84, %p85
      %p87 = scmp.ne.s32.totalorder %s76, %s77
      %p88 = scmp.eq.s32.totalorder %s24, 0
      %p89 = por %p87, %p88
      %p90 = scmp.ne.s32.totalorder %s76, %s77
      %p91 = scmp.eq.s32.totalorder %s25, 1
      %p92 = por %p90, %p91
      %p94 = scmp.ne.s32.totalorder %s77, %s93
      %p95 = scmp.eq.s32.totalorder %s25, 0
      %p96 = por %p94, %p95
      %s98 = sadd.s32 %s97, 1
      %p101 = scmp.eq.s32.totalorder %s19, 1
      %p102 = scmp.ne.s32.totalorder %s97, %s99
      %p103 = scmp.eq.s32.totalorder %s19, 0
      %p104 = por %p102, %p103
      %p105 = scmp.ne.s32.totalorder %s97, %s99
      %p106 = scmp.eq.s32.totalorder %s24, 1
      %p107 = por %p105, %p106
      %p108 = scmp.ne.s32.totalorder %s99, %s100
      %p109 = scmp.eq.s32.totalorder %s24, 0
      %p110 = por %p108, %p109
      %p111 = scmp.ne.s32.totalorder %s99, %s100
      %p112 = scmp.eq.s32.totalorder %s25, 1
      %p113 = por %p111, %p112
      %p115 = scmp.ne.s32.totalorder %s100, %s114
      %p116 = scmp.eq.s32.totalorder %s25, 0
      %p117 = por %p115, %p116
      %s119 = sadd.s32 %s118, 1
      %p122 = scmp.eq.s32.totalorder %s19, 1
      %p123 = scmp.ne.s32.totalorder %s118, %s120
      %p124 = scmp.eq.s32.totalorder %s19, 0
      %p125 = por %p123, %p124
      %p126 = scmp.ne.s32.totalorder %s118, %s120
      %p127 = scmp.eq.s32.totalorder %s24, 1
      %p128 = por %p126, %p127
      %p129 = scmp.ne.s32.totalorder %s120, %s121
      %p130 = scmp.eq.s32.totalorder %s24, 0
      %p131 = por %p129, %p130
      %p132 = scmp.ne.s32.totalorder %s120, %s121
      %p133 = scmp.eq.s32.totalorder %s25, 1
      %p134 = por %p132, %p133
      %p136 = scmp.ne.s32.totalorder %s121, %s135
      %p137 = scmp.eq.s32.totalorder %s25, 0
      %p138 = por %p136, %p137
      %s139 = ssub.s32 %s26, %s38
      %s140 = ssub.s32 %s27, %s34
      %s141 = sor.u32 %s139, %s140
      %p142 = scmp.eq.s32.totalorder %s141, 0
      %s144 = sadd.s32 %s143, 1
      %s145 = scalar_select %p142, %s143, %s144
      %p148 = pneg %p142
      %p149 = scmp.eq.s32.totalorder %s19, 1
      %p150 = por %p148, %p149
      %p151 = scmp.ne.s32.totalorder %s143, %s146
      %p152 = scmp.eq.s32.totalorder %s19, 0
      %p153 = por %p151, %p152
      %p154 = scmp.ne.s32.totalorder %s143, %s146
      %p155 = scmp.eq.s32.totalorder %s24, 1
      %p156 = por %p154, %p155
      %p157 = scmp.ne.s32.totalorder %s146, %s147
      %p158 = scmp.eq.s32.totalorder %s24, 0
      %p159 = por %p157, %p158
      %p160 = scmp.ne.s32.totalorder %s146, %s147
      %p161 = scmp.eq.s32.totalorder %s25, 1
      %p162 = por %p160, %p161
      %p164 = scmp.ne.s32.totalorder %s147, %s163
      %p165 = scmp.eq.s32.totalorder %s25, 0
      %p166 = por %p164, %p165
      %p167 = scmp.le.s32.totalorder 1, %s19
      %p168 = scmp.lt.s32.totalorder %s19, 3
      %p169 = pnand %p167, %p168
      %p170 = pneg %p169
      // Predicated region
      $region9: #{tpu_custom_call.1} parent=5 // pred_check
        _
      $region10: #{tpu_custom_call.1} parent=5 // pred_check_branch
        %172 = sbr.rel (%p169) target = $region12
      $region11: #{tpu_custom_call.1} parent=5 // pred_region
        %s173 = ssub.s32 %s19, 1
        // Predicated region
        $region13: #{tpu_custom_call.1} parent=11 // pred_check
          %p174 = pneg %p110
        $region14: #{tpu_custom_call.1} parent=11 // pred_check_branch
          %176 = sbr.rel (%p174) target = $region16
        $region15: #{tpu_custom_call.1} parent=11 // pred_region
          _
        $region16: #{tpu_custom_call.1} parent=11 // pred_fallthru
          _
        // Predicated region
        $region17: #{tpu_custom_call.1} parent=11 // pred_check
          %p177 = pneg %p131
        $region18: #{tpu_custom_call.1} parent=11 // pred_check_branch
          %179 = sbr.rel (%p177) target = $region20
        $region19: #{tpu_custom_call.1} parent=11 // pred_region
          _
        $region20: #{tpu_custom_call.1} parent=11 // pred_fallthru
          _
      $region12: #{tpu_custom_call.1} parent=5 // pred_fallthru
        _
      %p180 = scmp.lt.s32.totalorder %s19, 2
      // Predicated region
      $region21: #{tpu_custom_call.1} parent=5 // pred_check
        %p181 = pneg %p180
      $region22: #{tpu_custom_call.1} parent=5 // pred_check_branch
        %183 = sbr.rel (%p181) target = $region24
      $region23: #{tpu_custom_call.1} parent=5 // pred_region
        // Predicated region
        $region25: #{tpu_custom_call.1} parent=23 // pred_check
          %p184 = pneg %p53
        $region26: #{tpu_custom_call.1} parent=23 // pred_check_branch
          %186 = sbr.rel (%p184) target = $region28
        $region27: #{tpu_custom_call.1} parent=23 // pred_region
          %s187 = sand.u32 %s43, 1
          %s188 = scalar_lea.sflag [#allocation3], %s187
          %s189 = sand.u32 %s43, 1
          %s190 = smul.addr %s189, 4
          %s191 = scalar_lea.vmem [#allocation2], %s190
          %s193 = ssub.s32 64, 64
          %194 = vsyncadd %s188, %s193
          %s195 = smul.addr %s26, 2
          %s196 = sadd.s32 %s27, %s195
          %s197 = smul.addr %s196, 64
          %s198 = scalar_lea.hbm %s0, %s197
          %s200 = sshll.u32 %s191, 4
          %s201 = int_to_ptr.vmem [resolvable:$true] %s200
          %203 = dma.hbm_to_vmem [thread:$0]  %s198, 64, %s201, %s188
        $region28: #{tpu_custom_call.1} parent=23 // pred_fallthru
          _
        // Predicated region
        $region29: #{tpu_custom_call.1} parent=23 // pred_check
          %p204 = pneg %p83
        $region30: #{tpu_custom_call.1} parent=23 // pred_check_branch
          %206 = sbr.rel (%p204) target = $region32
        $region31: #{tpu_custom_call.1} parent=23 // pred_region
          %s207 = sand.u32 %s73, 1
          %s208 = scalar_lea.sflag [#allocation6], %s207
          %s209 = sand.u32 %s73, 1
          %s210 = smul.addr %s209, 4
          %s211 = scalar_lea.vmem [#allocation5], %s210
          %s212 = sadd.s32 %s27, 1
          %s214 = ssub.s32 64, 64
          %215 = vsyncadd %s208, %s214
          %s216 = smul.addr %s26, 2
          %s217 = sadd.s32 %s212, %s216
          %s218 = smul.addr %s217, 64
          %s219 = scalar_lea.hbm %s1, %s218
          %s221 = sshll.u32 %s211, 4
          %s222 = int_to_ptr.vmem [resolvable:$true] %s221
          %224 = dma.hbm_to_vmem [thread:$0]  %s219, 64, %s222, %s208
        $region32: #{tpu_custom_call.1} parent=23 // pred_fallthru
          _
      $region24: #{tpu_custom_call.1} parent=5 // pred_fallthru
        _
      %p225 = scmp.le.s32.totalorder 1, %s19
      %p226 = scmp.lt.s32.totalorder %s19, 3
      %p227 = pnand %p225, %p226
      %p228 = pneg %p227
      // Predicated region
      $region33: #{tpu_custom_call.1} parent=5 // pred_check
        _
      $region34: #{tpu_custom_call.1} parent=5 // pred_check_branch
        %230 = sbr.rel (%p227) target = $region36
      $region35: #{tpu_custom_call.1} parent=5 // pred_region
        %s231 = ssub.s32 %s19, 1
        %s232 = sand.u32 %s46, 1
        %s233 = scalar_lea.sflag [#allocation3], %s232
        %s234 = sand.u32 %s46, 1
        %s235 = smul.addr %s234, 4
        %s236 = scalar_lea.vmem [#allocation2], %s235
        // Predicated region
        $region37: #{tpu_custom_call.1} parent=35 // pred_check
          %p237 = pneg %p59
        $region38: #{tpu_custom_call.1} parent=35 // pred_check_branch
          %239 = sbr.rel (%p237) target = $region40
        $region39: #{tpu_custom_call.1} parent=35 // pred_region
          %240 = dma.done %s233, 64
        $region40: #{tpu_custom_call.1} parent=35 // pred_fallthru
          _
        %s241 = sand.u32 %s76, 1
        %s242 = scalar_lea.sflag [#allocation6], %s241
        %s243 = sand.u32 %s76, 1
        %s244 = smul.addr %s243, 4
        %s245 = scalar_lea.vmem [#allocation5], %s244
        // Predicated region
        $region41: #{tpu_custom_call.1} parent=35 // pred_check
          %p246 = pneg %p89
        $region42: #{tpu_custom_call.1} parent=35 // pred_check_branch
          %248 = sbr.rel (%p246) target = $region44
        $region43: #{tpu_custom_call.1} parent=35 // pred_region
          %249 = dma.done %s242, 64
        $region44: #{tpu_custom_call.1} parent=35 // pred_fallthru
          _
        %s250 = sand.u32 %s46, 1
        %s251 = scalar_lea.sflag [#allocation3], %s250
        %s252 = sand.u32 %s46, 1
        %s253 = smul.addr %s252, 4
        %s254 = scalar_lea.vmem [#allocation2], %s253
        %p255 = pneg %p59
        %p256 = pneg %p56
        %s257 = sand.u32 %s76, 1
        %s258 = scalar_lea.sflag [#allocation6], %s257
        %s259 = sand.u32 %s76, 1
        %s260 = smul.addr %s259, 4
        %s261 = scalar_lea.vmem [#allocation5], %s260
        %p262 = pneg %p89
        %p263 = pneg %p86
        %p264 = pneg %p110
        %p265 = pneg %p107
        %p266 = pneg %p131
        %p267 = pneg %p128
        %p268 = pneg %p159
        %p269 = pneg %p156
        %s270 = sand.u32 %s146, 1
        %s271 = scalar_lea.sflag [#allocation4], %s270
        %s272 = sand.u32 %s146, 1
        %s273 = smul.addr %s272, 8
        %s274 = scalar_lea.vmem [#allocation7], %s273
        %s275 = sadd.s32 %s29, 1
        %v276 = vld [vmem:[%s236] sm:$0xf]
        %v277 = vld [vmem:[%s245] sm:$0xf]
        %v280 = vrot.slane %v276, 4
        %v281 = vrot.slane %v277, 4
        %282 = vrot.lane.b32.xlu0 %v280, 127
        %v283 = vpop.permute.xlu0 %282
        %284 = vrot.lane.b32.xlu0 %v281, 127
        %v285 = vpop.permute.xlu0 %284
        %vm286 = vcmask 1039360
        %v287 = vsel %vm286, %v283, %v285
        %289 = vrot.lane.b32.xlu0 %v276, 126
        %v290 = vpop.permute.xlu0 %289
        %291 = vrot.lane.b32.xlu0 %v277, 126
        %v292 = vpop.permute.xlu0 %291
        %vm293 = vcmask 1031168
        %v294 = vsel %vm293, %v290, %v292
        %vm295 = vcmask 1043456
        %v296 = vsel %vm295, %v276, %v287
        %v297 = vld [vmem:[%s2] sm:$0xff]
        %v298 = vld [vmem:[%s3] sm:$0xff]
        %300 = vset.pattern.permute.xlu0 0
        %301 = vperm.xlu0 %300, %v298
        %v302 = vpop.permute.xlu0 %301
        %vm304 = vcmask 97280
        %v306 = vsel %vm304, %v297, 0
        %v308 = vsel %vm295, %v294, 0
        %310 = vmatprep.subr.mxu0 0.0
        %311 = vmatpush1.msra.mxu0 %v296
        %312 = vmatprep.subr.mxu0 0.0
        %313 = vmatpush1.msra.mxu0 %v308
        %314 = vmatprep.subr.mxu0 0.0
        %315 = vmatpush1.msra.mxu0 0.0
        %316 = vmatprep.subr.mxu0 0.0
        %317 = vmatpush1.msra.mxu0 0.0
        %318 = vmatprep.subr.mxu0 0.0
        %319 = vmatpush1.msra.mxu0 0.0
        %320 = vmatprep.subr.mxu0 0.0
        %321 = vmatpush1.msra.mxu0 0.0
        %322 = vmatprep.subr.mxu0 0.0
        %323 = vmatpush1.msra.mxu0 0.0
        %324 = vmatprep.subr.mxu0 0.0
        %325 = vmatpush1.msra.mxu0 0.0
        %326 = vmatprep.subr.mxu0 0.0
        %327 = vmatpush1.msra.mxu0 0.0
        %328 = vmatprep.subr.mxu0 0.0
        %329 = vmatpush1.msra.mxu0 0.0
        %330 = vmatprep.subr.mxu0 0.0
        %331 = vmatpush1.msra.mxu0 0.0
        %332 = vmatprep.subr.mxu0 0.0
        %333 = vmatpush1.msra.mxu0 0.0
        %334 = vmatprep.subr.mxu0 0.0
        %335 = vmatpush1.msra.mxu0 0.0
        %336 = vmatprep.subr.mxu0 0.0
        %337 = vmatpush1.msra.mxu0 0.0
        %338 = vmatprep.subr.mxu0 0.0
        %339 = vmatpush1.msra.mxu0 0.0
        %340 = vmatprep.subr.mxu0 0.0
        %341 = vmatpush1.msra.mxu0 0.0
        %342 = vmatprep.subr.mxu0 0.0
        %343 = vmatpush1.msra.mxu0 0.0
        %344 = vmatprep.subr.mxu0 0.0
        %345 = vmatpush1.msra.mxu0 0.0
        %346 = vmatprep.subr.mxu0 0.0
        %347 = vmatpush1.msra.mxu0 0.0
        %348 = vmatprep.subr.mxu0 0.0
        %349 = vmatpush1.msra.mxu0 0.0
        %350 = vmatprep.subr.mxu0 0.0
        %351 = vmatpush1.msra.mxu0 0.0
        %352 = vmatprep.subr.mxu0 0.0
        %353 = vmatpush1.msra.mxu0 0.0
        %354 = vmatprep.subr.mxu0 0.0
        %355 = vmatpush1.msra.mxu0 0.0
        %356 = vmatprep.subr.mxu0 0.0
        %357 = vmatpush1.msra.mxu0 0.0
        %358 = vmatprep.subr.mxu0 0.0
        %359 = vmatpush1.msra.mxu0 0.0
        %360 = vmatprep.subr.mxu0 0.0
        %361 = vmatpush1.msra.mxu0 0.0
        %362 = vmatprep.subr.mxu0 0.0
        %363 = vmatpush1.msra.mxu0 0.0
        %364 = vmatprep.subr.mxu0 0.0
        %365 = vmatpush1.msra.mxu0 0.0
        %366 = vmatprep.subr.mxu0 0.0
        %367 = vmatpush1.msra.mxu0 0.0
        %368 = vmatprep.subr.mxu0 0.0
        %369 = vmatpush1.msra.mxu0 0.0
        %370 = vmatprep.subr.mxu0 0.0
        %371 = vmatpush1.msra.mxu0 0.0
        %372 = vmatprep.subr.mxu0 0.0
        %373 = vmatpush1.msra.mxu0 0.0
        %374 = vmatprep.mubr.f32.mxu0 0.0
        %375 = vmatmul.mubr.f32.gmra.mrb[0].mxu0 %v306
        %v376 = vpop.f32.mrb[0].mxu0
        %v377 = vadd.f32 %v302, %v376
        %v378 = vpop.f32.mrb[0].mxu0
        %379 = vdwg.mxu0
        %380 = vst [vmem:[%s274] sm:$0xff] %v377
        %s381 = sand.u32 %s146, 1
        %s382 = scalar_lea.sflag [#allocation4], %s381
        %s383 = sand.u32 %s146, 1
        %s384 = smul.addr %s383, 8
        %s385 = scalar_lea.vmem [#allocation7], %s384
        // Predicated region
        $region45: #{tpu_custom_call.1} parent=35 // pred_check
          %p386 = pneg %p156
        $region46: #{tpu_custom_call.1} parent=35 // pred_check_branch
          %388 = sbr.rel (%p386) target = $region48
        $region47: #{tpu_custom_call.1} parent=35 // pred_region
          %s390 = ssub.s32 128, 128
          %391 = vsyncadd %s382, %s390
          %s392 = sadd.s32 %s29, %s28
          %s393 = smul.addr %s392, 128
          %s394 = scalar_lea.hbm %s4, %s393
          %s396 = sshll.u32 %s385, 4
          %s397 = int_to_ptr.vmem [resolvable:$true] %s396
          %399 = dma.vmem_to_hbm [thread:$0]  %s397, 128, %s394, %s382
        $region48: #{tpu_custom_call.1} parent=35 // pred_fallthru
          _
      $region36: #{tpu_custom_call.1} parent=5 // pred_fallthru
        _
      %p400 = scmp.le.s32.totalorder 2, %s19
      // Predicated region
      $region49: #{tpu_custom_call.1} parent=5 // pred_check
        %p401 = pneg %p400
      $region50: #{tpu_custom_call.1} parent=5 // pred_check_branch
        %403 = sbr.rel (%p401) target = $region52
      $region51: #{tpu_custom_call.1} parent=5 // pred_region
        %s404 = ssub.s32 %s19, 2
        // Predicated region
        $region53: #{tpu_custom_call.1} parent=51 // pred_check
          %p405 = pneg %p162
        $region54: #{tpu_custom_call.1} parent=51 // pred_check_branch
          %407 = sbr.rel (%p405) target = $region56
        $region55: #{tpu_custom_call.1} parent=51 // pred_region
          %s408 = sand.u32 %s147, 1
          %s409 = scalar_lea.sflag [#allocation4], %s408
          %s410 = sand.u32 %s147, 1
          %s411 = smul.addr %s410, 8
          %s412 = scalar_lea.vmem [#allocation7], %s411
          %413 = dma.done %s409, 128
        $region56: #{tpu_custom_call.1} parent=51 // pred_fallthru
          _
      $region52: #{tpu_custom_call.1} parent=5 // pred_fallthru
        _
    $region6: #{tpu_custom_call.1} parent=1 // loop_footer
      %s23 = sadd.s32 1, %s19
    $region7: #{tpu_custom_call.1} parent=1 // loop_footer_branch
      %18 = sbr.rel target = $region3
    $region8: #{tpu_custom_call.1} parent=1 // loop_exit
      _
    %414 = vsyncpa [#allocation3], 1
    %s415 = scalar_lea.sflag [#allocation3], 1
    %416 = vsyncpa %s415, 1
    %417 = vsyncpa [#allocation6], 1
    %s418 = scalar_lea.sflag [#allocation6], 1
    %419 = vsyncpa %s418, 1
    %420 = vsyncpa [#allocation4], 1
    %s421 = scalar_lea.sflag [#allocation4], 1
    %422 = vsyncpa %s421, 1

</llo_original>
